<compile_context>
chip_gen: v5e
topology: v5e:2x2
jax: 0.10.0
libtpu: 0.0.40
codegen_flags: <defaults>
</compile_context>

<pallas_src>
import functools

import jax
import jax.numpy as jnp
from jax.experimental import pallas as pl
from jax.experimental.pallas import tpu as pltpu


def _round_up(n, m):
    return ((n + m - 1) // m) * m


def _classif_kernel(x_ref, w1_ref, b1_ref, w2_ref, b2_ref, o_ref, *, softmax):
    # fc1 + relu.  x arrives in the caller's dtype (f32) and is cast to bf16 on
    # the VPU right before the MXU op -> no extra HBM pass for a cast copy.
    x = x_ref[...].astype(jnp.bfloat16)                               # (TM, 1000)
    h = jnp.dot(x, w1_ref[...], preferred_element_type=jnp.float32)   # (TM, 128)
    h = jnp.maximum(h + b1_ref[...], 0.0)

    # fc2 (f32 accumulation, bf16 MXU inputs).
    logits = jnp.dot(h.astype(jnp.bfloat16), w2_ref[...],
                     preferred_element_type=jnp.float32)
    logits = logits + b2_ref[...]        # padded class lanes carry -1e30 (softmax)

    if softmax:
        m = jnp.max(logits, axis=-1, keepdims=True)
        e = jnp.exp(logits - m)          # exp(-1e30 - m) == 0 on padded lanes
        o_ref[...] = (e / jnp.sum(e, axis=-1, keepdims=True)).astype(o_ref.dtype)
    else:
        o_ref[...] = (1.0 / (1.0 + jnp.exp(-logits))).astype(o_ref.dtype)


def prepare_classif_params(w1, b1, w2, b2, *, softmax=True):
    """One-time glue (hoisted out of the per-call path): transpose/pad/cast the
    PyTorch nn.Linear params.  w1:(100,1000) b1:(100,) w2:(C,100) b2:(C,)."""
    HID, IN = w1.shape
    C = w2.shape[0]
    HID_P = _round_up(HID, 128)          # 128 : lane-dense hidden
    C_P = _round_up(C, 128)              # 128 : lane-dense class dim

    w1_t = jnp.zeros((IN, HID_P), jnp.bfloat16).at[:, :HID].set(
        jnp.asarray(w1, jnp.bfloat16).T)                              # (1000, 128)
    b1_r = jnp.zeros((1, HID_P), jnp.float32).at[0, :HID].set(
        jnp.asarray(b1, jnp.float32))                                 # (1, 128)
    w2_t = jnp.zeros((HID_P, C_P), jnp.bfloat16).at[:HID, :C].set(
        jnp.asarray(w2, jnp.bfloat16).T)                              # (128, 128)
    pad_val = -1e30 if softmax else 0.0  # kill padded class lanes under exp()
    b2_r = jnp.full((1, C_P), pad_val, jnp.float32).at[0, :C].set(
        jnp.asarray(b2, jnp.float32))                                 # (1, 128)
    return w1_t, b1_r, w2_t, b2_r


@functools.partial(jax.jit, static_argnames=("nb_class", "softmax"))
def classif_forward(x, w1_t, b1_r, w2_t, b2_r, *, nb_class, softmax=True):
    """x: (B, 1000) in any float dtype (kept native; cast happens in-kernel)."""
    B, IN = x.shape
    HID_P = w1_t.shape[1]
    C_P = w2_t.shape[1]
    C = nb_class

    # Batch tile: multiple of 8, batch dim never padded — Pallas masks the ragged
    # last block.  TM cap chosen so the double-buffered f32 x tile fits in VMEM on
    # v5e/v6e/v7x with vmem_limit_bytes raised below.
    TM_CAP = 2048
    B8 = _round_up(B, 8)
    TM = min(TM_CAP, B8)
    if B8 >= 16 and pl.cdiv(B, TM) < 2:
        # Keep >= 2 batch tiles so the "parallel" axis can split across v7x's 2 TCs.
        TM = _round_up(pl.cdiv(B8, 2), 8)
    grid = (pl.cdiv(B, TM),)

    vmem_bytes = (2 * TM * IN * 4                       # x double buffer (f32)
                  + 2 * TM * C_P * 4                    # output double buffer
                  + 2 * (IN * HID_P + HID_P * C_P) * 2  # resident weights
                  + 2 * (HID_P + C_P) * 4               # biases
                  + 6 * TM * C_P * 4                    # in-kernel temporaries
                  + (4 << 20))                          # compiler scratch headroom
    vmem_limit = min(max(vmem_bytes, 16 << 20), 48 << 20)

    cost = pl.CostEstimate(
        flops=2 * B * IN * HID_P + 2 * B * HID_P * C_P,
        transcendentals=B * C_P,
        bytes_accessed=(B * IN * 4 + IN * HID_P * 2 + HID_P * C_P * 2
                        + (HID_P + C_P) * 4 + B * C_P * 4),
    )

    out = pl.pallas_call(
        functools.partial(_classif_kernel, softmax=softmax),
        out_shape=jax.ShapeDtypeStruct((B, C_P), jnp.float32),
        grid=grid,
        in_specs=[
            pl.BlockSpec((TM, IN), lambda i: (i, 0)),         # x tiles, pipelined
            pl.BlockSpec((IN, HID_P), lambda i: (0, 0)),      # w1: VMEM-resident
            pl.BlockSpec((1, HID_P), lambda i: (0, 0)),       # b1
            pl.BlockSpec((HID_P, C_P), lambda i: (0, 0)),     # w2
            pl.BlockSpec((1, C_P), lambda i: (0, 0)),         # b2
        ],
        out_specs=pl.BlockSpec((TM, C_P), lambda i: (i, 0)),  # lane-dense (TM,128)
        compiler_params=pltpu.CompilerParams(
            dimension_semantics=("parallel",),                # megacore split (v7x)
            vmem_limit_bytes=vmem_limit),
        cost_estimate=cost,
    )(x, w1_t, b1_r, w2_t, b2_r)

    out = out[:, :C]                 # fuses under jit; batch dim was never padded
    if softmax:
        return out
    return out.reshape(-1)           # matches .sigmoid().reshape(-1)


if __name__ == "__main__":
    B = 8          # small batch
    IN = 1000      # fixed by fc1
    HID = 100      # fixed by fc1/fc2
    NB_CLASS = 10  # small nb_class

    key = jax.random.PRNGKey(0)
    kx, kw1, kb1, kw2, kb2 = jax.random.split(key, 5)

    x = jax.random.normal(kx, (B, IN), dtype=jnp.float32)
    # Deterministic synthetic params (PyTorch nn.Linear layout: (out, in)).
    w1 = jax.random.normal(kw1, (HID, IN), dtype=jnp.float32) * 0.02
    b1 = jax.random.normal(kb1, (HID,), dtype=jnp.float32) * 0.02
    w2 = jax.random.normal(kw2, (NB_CLASS, HID), dtype=jnp.float32) * 0.02
    b2 = jax.random.normal(kb2, (NB_CLASS,), dtype=jnp.float32) * 0.02

    h_ref = jnp.maximum(x @ w1.T + b1, 0.0)

    # softmax=True path
    params_sm = prepare_classif_params(w1, b1, w2, b2, softmax=True)
    out = jax.block_until_ready(
        classif_forward(x, *params_sm, nb_class=NB_CLASS, softmax=True))
    ref = jax.nn.softmax(h_ref @ w2.T + b2, axis=-1)
    assert out.shape == (B, NB_CLASS)
    # Tolerance accounts for bf16 MXU inputs (x, h cast in-kernel).
    assert jnp.allclose(out, ref, atol=1e-2, rtol=1e-2), float(
        jnp.max(jnp.abs(out - ref)))

    # softmax=False (sigmoid) path
    params_sg = prepare_classif_params(w1, b1, w2, b2, softmax=False)
    out_sig = jax.block_until_ready(
        classif_forward(x, *params_sg, nb_class=NB_CLASS, softmax=False))
    ref_sig = jax.nn.sigmoid(h_ref @ w2.T + b2).reshape(-1)
    assert out_sig.shape == (B * NB_CLASS,)
    assert jnp.allclose(out_sig, ref_sig, atol=1e-2, rtol=1e-2)

    print("KERNEL_OK")
</pallas_src>

<mosaic_0001>
module attributes {stable_mosaic.version = 11 : i64} {
  func.func @_classif_kernel(%arg0: i32, %arg1: memref<8x1000xf32, #tpu.memory_space<vmem>>, %arg2: memref<1000x128xbf16, #tpu.memory_space<vmem>>, %arg3: memref<1x128xf32, #tpu.memory_space<vmem>>, %arg4: memref<128x128xbf16, #tpu.memory_space<vmem>>, %arg5: memref<1x128xf32, #tpu.memory_space<vmem>>, %arg6: memref<8x128xf32, #tpu.memory_space<vmem>>) attributes {dimension_semantics = [#tpu.dimension_semantics<parallel>], iteration_bounds = array<i64: 1>, scalar_prefetch = 0 : i64, scratch_operands = 0 : i64, tpu.core_type = #tpu.core_type<tc>, window_params = [{transform_indices = @transform_0, window_bounds = array<i64: 8, 1000>}, {pipeline_mode = #tpu.pipeline_mode<synchronous>, transform_indices = @transform_1, window_bounds = array<i64: 1000, 128>}, {pipeline_mode = #tpu.pipeline_mode<synchronous>, transform_indices = @transform_2, window_bounds = array<i64: 1, 128>}, {pipeline_mode = #tpu.pipeline_mode<synchronous>, transform_indices = @transform_3, window_bounds = array<i64: 128, 128>}, {pipeline_mode = #tpu.pipeline_mode<synchronous>, transform_indices = @transform_4, window_bounds = array<i64: 1, 128>}, {transform_indices = @transform_5, window_bounds = array<i64: 8, 128>}]} {
    %c0 = arith.constant 0 : index
    %c0_0 = arith.constant 0 : index
    %0 = vector.load %arg1[%c0, %c0_0] : memref<8x1000xf32, #tpu.memory_space<vmem>>, vector<8x1000xf32>
    %1 = arith.truncf %0 : vector<8x1000xf32> to vector<8x1000xbf16>
    %c0_1 = arith.constant 0 : index
    %c0_2 = arith.constant 0 : index
    %2 = vector.load %arg2[%c0_1, %c0_2] : memref<1000x128xbf16, #tpu.memory_space<vmem>>, vector<1000x128xbf16>
    %cst = arith.constant dense<0.000000e+00> : vector<8x128xf32>
    %3 = tpu.matmul %1, %2, %cst {dimension_numbers = #tpu.dot_dimension_numbers<[1], [0], [0], [1], [0, 0, 1, 1], [], []>} : vector<8x1000xbf16>, vector<1000x128xbf16>, vector<8x128xf32> -> vector<8x128xf32>
    %c0_3 = arith.constant 0 : index
    %c0_4 = arith.constant 0 : index
    %4 = vector.load %arg3[%c0_3, %c0_4] : memref<1x128xf32, #tpu.memory_space<vmem>>, vector<1x128xf32>
    %5 = vector.broadcast %4 : vector<1x128xf32> to vector<8x128xf32>
    %6 = arith.addf %3, %5 : vector<8x128xf32>
    %cst_5 = arith.constant 0.000000e+00 : f32
    %7 = vector.broadcast %cst_5 : f32 to vector<8x128xf32>
    %8 = arith.maximumf %6, %7 : vector<8x128xf32>
    %9 = arith.truncf %8 : vector<8x128xf32> to vector<8x128xbf16>
    %c0_6 = arith.constant 0 : index
    %c0_7 = arith.constant 0 : index
    %10 = vector.load %arg4[%c0_6, %c0_7] : memref<128x128xbf16, #tpu.memory_space<vmem>>, vector<128x128xbf16>
    %cst_8 = arith.constant dense<0.000000e+00> : vector<8x128xf32>
    %11 = tpu.matmul %9, %10, %cst_8 {dimension_numbers = #tpu.dot_dimension_numbers<[1], [0], [0], [1], [0, 0, 1, 1], [], []>} : vector<8x128xbf16>, vector<128x128xbf16>, vector<8x128xf32> -> vector<8x128xf32>
    %c0_9 = arith.constant 0 : index
    %c0_10 = arith.constant 0 : index
    %12 = vector.load %arg5[%c0_9, %c0_10] : memref<1x128xf32, #tpu.memory_space<vmem>>, vector<1x128xf32>
    %13 = vector.broadcast %12 : vector<1x128xf32> to vector<8x128xf32>
    %14 = arith.addf %11, %13 : vector<8x128xf32>
    %cst_11 = arith.constant dense<0xFF800000> : vector<8xf32>
    %15 = vector.multi_reduction <maximumf>, %14, %cst_11 [1] : vector<8x128xf32> to vector<8xf32>
    %16 = vector.shape_cast %15 : vector<8xf32> to vector<8x1xf32>
    %17 = vector.broadcast %16 : vector<8x1xf32> to vector<8x128xf32>
    %18 = arith.subf %14, %17 : vector<8x128xf32>
    %19 = math.exp %18 : vector<8x128xf32>
    %cst_12 = arith.constant dense<0.000000e+00> : vector<8xf32>
    %20 = vector.multi_reduction <add>, %19, %cst_12 [1] : vector<8x128xf32> to vector<8xf32>
    %21 = vector.shape_cast %20 : vector<8xf32> to vector<8x1xf32>
    %22 = vector.broadcast %21 : vector<8x1xf32> to vector<8x128xf32>
    %23 = arith.divf %19, %22 : vector<8x128xf32>
    %c0_13 = arith.constant 0 : index
    %c0_14 = arith.constant 0 : index
    %24 = vector.load %arg6[%c0_13, %c0_14] : memref<8x128xf32, #tpu.memory_space<vmem>>, vector<8x128xf32>
    tpu.vector_store %arg6[%c0_13, %c0_14], %23 {strides = array<i32>} : memref<8x128xf32, #tpu.memory_space<vmem>>, vector<8x128xf32>,
    return
  }
  func.func @transform_0(%arg0: i32) -> (i32, i32) {
    %c0_i32 = arith.constant 0 : i32
    %c0_i32_0 = arith.constant 0 : i32
    return %arg0, %c0_i32 : i32, i32
  }
  func.func @transform_1(%arg0: i32) -> (i32, i32) {
    %c0_i32 = arith.constant 0 : i32
    %c0_i32_0 = arith.constant 0 : i32
    %c0_i32_1 = arith.constant 0 : i32
    return %c0_i32, %c0_i32_0 : i32, i32
  }
  func.func @transform_2(%arg0: i32) -> (i32, i32) {
    %c0_i32 = arith.constant 0 : i32
    %c0_i32_0 = arith.constant 0 : i32
    %c0_i32_1 = arith.constant 0 : i32
    return %c0_i32, %c0_i32_0 : i32, i32
  }
  func.func @transform_3(%arg0: i32) -> (i32, i32) {
    %c0_i32 = arith.constant 0 : i32
    %c0_i32_0 = arith.constant 0 : i32
    %c0_i32_1 = arith.constant 0 : i32
    return %c0_i32, %c0_i32_0 : i32, i32
  }
  func.func @transform_4(%arg0: i32) -> (i32, i32) {
    %c0_i32 = arith.constant 0 : i32
    %c0_i32_0 = arith.constant 0 : i32
    %c0_i32_1 = arith.constant 0 : i32
    return %c0_i32, %c0_i32_0 : i32, i32
  }
  func.func @transform_5(%arg0: i32) -> (i32, i32) {
    %c0_i32 = arith.constant 0 : i32
    %c0_i32_0 = arith.constant 0 : i32
    return %arg0, %c0_i32 : i32, i32
  }
}

</mosaic_0001>

<llo_original>
// kernel: classif_forward.1
$region0: #{classif_forward.1}
  #allocation0 [shape = 'u32[]', space=smem, size = 0x4, offset = 0x4, fixed_abs, tag = 'smem constant byte address 0x4 - core index']
  #allocation1 [shape = 'u32[72,128]{1,0:T(1,128)}', space=vmem, size = 0x9000, scoped, tag = 'internal scratch']
  %s0 = inlined_call_operand.hbm [shape: f32[8,1000], index: 0, kind: input, shape index: {}]
  %s1 = inlined_call_operand.hbm [shape: bf16[1000,128], index: 1, kind: input, shape index: {}]
  %s2 = inlined_call_operand.vmem [shape: f32[1,128], index: 2, kind: input, shape index: {}]
  %s3 = inlined_call_operand.hbm [shape: bf16[128,128], index: 3, kind: input, shape index: {}]
  %s4 = inlined_call_operand.vmem [shape: f32[1,128], index: 4, kind: input, shape index: {}]
  %s5 = inlined_call_operand.hbm [shape: f32[8,128], index: 5, kind: output, shape index: {}]
  %s6 = sld [smem:[#allocation0]]
  $region42: #{classif_forward.1} parent=0
    _
  %s8 = ssub.s32 1, %s6
  %s9 = scalar_select 0, %s8, %s6
  $region1: #{classif_forward.1} parent=0
    #allocation2 [shape = 'u8[32768]{0}', space=vmem, size = 0x8000, scoped, tag = 'input window, operand 0, single buffered']
    #allocation3 [shape = 's32[1]{0}', space=sflag, size = 0x4, scoped, tag = 'scoped memory for classif_forward.1']
    #allocation4 [shape = 's32[1]{0}', space=sflag, size = 0x4, scoped, tag = 'scoped memory for classif_forward.1']
    #allocation5 [shape = 'u8[256000]{0}', space=vmem, size = 0x3e800, scoped, tag = 'input window, operand 1, single buffered']
    #allocation6 [shape = 's32[1]{0}', space=sflag, size = 0x4, scoped, tag = 'scoped memory for classif_forward.1']
    #allocation7 [shape = 'u8[32768]{0}', space=vmem, size = 0x8000, scoped, tag = 'input window, operand 3, single buffered']
    #allocation8 [shape = 'u8[4096]{0}', space=vmem, size = 0x1000, scoped, tag = 'output window, operand 0, single buffered']
    %10 = vsyncpa [#allocation3], 0
    %11 = vsyncpa [#allocation6], 0
    %12 = vsyncpa [#allocation4], 0
    // Predicated region
    $region2: #{classif_forward.1} parent=1 // pred_check
      _
    $region3: #{classif_forward.1} parent=1 // pred_check_branch
      %14 = sbr.rel (0) target = $region5
    $region4: #{classif_forward.1} parent=1 // pred_region
      %16 = vsyncadd [#allocation3], 0
      %s18 = sshll.u32 %s0, 4
      %s19 = int_to_ptr.hbm [resolvable:$true] %s18
      %s20 = sshll.u32 [#allocation2], 4
      %s21 = int_to_ptr.vmem [resolvable:$true] %s20
      %23 = dma.hbm_to_vmem [thread:$0]  %s19, 1024, %s21, [#allocation3]
    $region5: #{classif_forward.1} parent=1 // pred_fallthru
      _
    // Predicated region
    $region6: #{classif_forward.1} parent=1 // pred_check
      _
    $region7: #{classif_forward.1} parent=1 // pred_check_branch
      %25 = sbr.rel (0) target = $region9
    $region8: #{classif_forward.1} parent=1 // pred_region
      %27 = vsyncadd [#allocation6], 0
      %s28 = sshll.u32 %s1, 4
      %s29 = int_to_ptr.hbm [resolvable:$true] %s28
      %s30 = sshll.u32 [#allocation5], 4
      %s31 = int_to_ptr.vmem [resolvable:$true] %s30
      %36 = dma.hbm_to_vmem [thread:$0]  %s29, 8000, %s31, [#allocation6], 64, 64, 4
    $region9: #{classif_forward.1} parent=1 // pred_fallthru
      _
    // Predicated region
    $region10: #{classif_forward.1} parent=1 // pred_check
      _
    $region11: #{classif_forward.1} parent=1 // pred_check_branch
      %38 = sbr.rel (0) target = $region13
    $region12: #{classif_forward.1} parent=1 // pred_region
      _
    $region13: #{classif_forward.1} parent=1 // pred_fallthru
      _
    // Predicated region
    $region14: #{classif_forward.1} parent=1 // pred_check
      _
    $region15: #{classif_forward.1} parent=1 // pred_check_branch
      %40 = sbr.rel (0) target = $region17
    $region16: #{classif_forward.1} parent=1 // pred_region
      %42 = vsyncadd [#allocation6], 0
      %s43 = sshll.u32 %s3, 4
      %s44 = int_to_ptr.hbm [resolvable:$true] %s43
      %s45 = sshll.u32 [#allocation7], 4
      %s46 = int_to_ptr.vmem [resolvable:$true] %s45
      %51 = dma.hbm_to_vmem [thread:$0]  %s44, 1024, %s46, [#allocation6], 64, 64, 4
    $region17: #{classif_forward.1} parent=1 // pred_fallthru
      _
    // Predicated region
    $region18: #{classif_forward.1} parent=1 // pred_check
      _
    $region19: #{classif_forward.1} parent=1 // pred_check_branch
      %53 = sbr.rel (0) target = $region21
    $region20: #{classif_forward.1} parent=1 // pred_region
      _
    $region21: #{classif_forward.1} parent=1 // pred_fallthru
      _
    // Predicated region
    $region22: #{classif_forward.1} parent=1 // pred_check
      _
    $region23: #{classif_forward.1} parent=1 // pred_check_branch
      %55 = sbr.rel (0) target = $region25
    $region24: #{classif_forward.1} parent=1 // pred_region
      %57 = dma.done [#allocation3], 1024
    $region25: #{classif_forward.1} parent=1 // pred_fallthru
      _
    // Predicated region
    $region26: #{classif_forward.1} parent=1 // pred_check
      _
    $region27: #{classif_forward.1} parent=1 // pred_check_branch
      %59 = sbr.rel (0) target = $region29
    $region28: #{classif_forward.1} parent=1 // pred_region
      %61 = dma.done [#allocation6], 8000
    $region29: #{classif_forward.1} parent=1 // pred_fallthru
      _
    // Predicated region
    $region30: #{classif_forward.1} parent=1 // pred_check
      _
    $region31: #{classif_forward.1} parent=1 // pred_check_branch
      %63 = sbr.rel (0) target = $region33
    $region32: #{classif_forward.1} parent=1 // pred_region
      %65 = dma.done [#allocation6], 1024
    $region33: #{classif_forward.1} parent=1 // pred_fallthru
      _
    %v67 = vld [vmem:[#allocation2] sm:$0xff]
    %v68 = vld [vmem:[#allocation2 + $0x8] sm:$0xff]
    %v69 = vld [vmem:[#allocation2 + $0x10] sm:$0xff]
    %v70 = vld [vmem:[#allocation2 + $0x18] sm:$0xff]
    %v71 = vld [vmem:[#allocation2 + $0x20] sm:$0xff]
    %v72 = vld [vmem:[#allocation2 + $0x28] sm:$0xff]
    %v73 = vld [vmem:[#allocation2 + $0x30] sm:$0xff]
    %v74 = vld [vmem:[#allocation2 + $0x38] sm:$0xff]
    %v75 = vpack.c.bf16 %v67, %v67
    %v76 = vpack.c.bf16 %v68, %v68
    %v77 = vpack.c.bf16 %v69, %v69
    %v78 = vpack.c.bf16 %v70, %v70
    %v79 = vpack.c.bf16 %v71, %v71
    %v80 = vpack.c.bf16 %v72, %v72
    %v81 = vpack.c.bf16 %v73, %v73
    %v82 = vpack.c.bf16 %v74, %v74
    %v83 = vld [vmem:[#allocation5] sm:$0xf]
    %v84 = vld [vmem:[#allocation5 + $0x4] sm:$0xf]
    %v85 = vld [vmem:[#allocation5 + $0x8] sm:$0xf]
    %v86 = vld [vmem:[#allocation5 + $0xc] sm:$0xf]
    %v87 = vld [vmem:[#allocation5 + $0x10] sm:$0xf]
    %v88 = vld [vmem:[#allocation5 + $0x14] sm:$0xf]
    %v89 = vld [vmem:[#allocation5 + $0x18] sm:$0xf]
    %v90 = vld [vmem:[#allocation5 + $0x1c] sm:$0xf]
    %v91 = vld [vmem:[#allocation5 + $0x20] sm:$0xf]
    %v92 = vld [vmem:[#allocation5 + $0x24] sm:$0xf]
    %v93 = vld [vmem:[#allocation5 + $0x28] sm:$0xf]
    %v94 = vld [vmem:[#allocation5 + $0x2c] sm:$0xf]
    %v95 = vld [vmem:[#allocation5 + $0x30] sm:$0xf]
    %v96 = vld [vmem:[#allocation5 + $0x34] sm:$0xf]
    %v97 = vld [vmem:[#allocation5 + $0x38] sm:$0xf]
    %v98 = vld [vmem:[#allocation5 + $0x3c] sm:$0xf]
    %v99 = vld [vmem:[#allocation5 + $0x40] sm:$0xf]
    %v100 = vld [vmem:[#allocation5 + $0x44] sm:$0xf]
    %v101 = vld [vmem:[#allocation5 + $0x48] sm:$0xf]
    %v102 = vld [vmem:[#allocation5 + $0x4c] sm:$0xf]
    %v103 = vld [vmem:[#allocation5 + $0x50] sm:$0xf]
    %v104 = vld [vmem:[#allocation5 + $0x54] sm:$0xf]
    %v105 = vld [vmem:[#allocation5 + $0x58] sm:$0xf]
    %v106 = vld [vmem:[#allocation5 + $0x5c] sm:$0xf]
    %v107 = vld [vmem:[#allocation5 + $0x60] sm:$0xf]
    %v108 = vld [vmem:[#allocation5 + $0x64] sm:$0xf]
    %v109 = vld [vmem:[#allocation5 + $0x68] sm:$0xf]
    %v110 = vld [vmem:[#allocation5 + $0x6c] sm:$0xf]
    %v111 = vld [vmem:[#allocation5 + $0x70] sm:$0xf]
    %v112 = vld [vmem:[#allocation5 + $0x74] sm:$0xf]
    %v113 = vld [vmem:[#allocation5 + $0x78] sm:$0xf]
    %v114 = vld [vmem:[#allocation5 + $0x7c] sm:$0xf]
    %v115 = vld [vmem:[#allocation5 + $0x80] sm:$0xf]
    %v116 = vld [vmem:[#allocation5 + $0x84] sm:$0xf]
    %v117 = vld [vmem:[#allocation5 + $0x88] sm:$0xf]
    %v118 = vld [vmem:[#allocation5 + $0x8c] sm:$0xf]
    %v119 = vld [vmem:[#allocation5 + $0x90] sm:$0xf]
    %v120 = vld [vmem:[#allocation5 + $0x94] sm:$0xf]
    %v121 = vld [vmem:[#allocation5 + $0x98] sm:$0xf]
    %v122 = vld [vmem:[#allocation5 + $0x9c] sm:$0xf]
    %v123 = vld [vmem:[#allocation5 + $0xa0] sm:$0xf]
    %v124 = vld [vmem:[#allocation5 + $0xa4] sm:$0xf]
    %v125 = vld [vmem:[#allocation5 + $0xa8] sm:$0xf]
    %v126 = vld [vmem:[#allocation5 + $0xac] sm:$0xf]
    %v127 = vld [vmem:[#allocation5 + $0xb0] sm:$0xf]
    %v128 = vld [vmem:[#allocation5 + $0xb4] sm:$0xf]
    %v129 = vld [vmem:[#allocation5 + $0xb8] sm:$0xf]
    %v130 = vld [vmem:[#allocation5 + $0xbc] sm:$0xf]
    %v131 = vld [vmem:[#allocation5 + $0xc0] sm:$0xf]
    %v132 = vld [vmem:[#allocation5 + $0xc4] sm:$0xf]
    %v133 = vld [vmem:[#allocation5 + $0xc8] sm:$0xf]
    %v134 = vld [vmem:[#allocation5 + $0xcc] sm:$0xf]
    %v135 = vld [vmem:[#allocation5 + $0xd0] sm:$0xf]
    %v136 = vld [vmem:[#allocation5 + $0xd4] sm:$0xf]
    %v137 = vld [vmem:[#allocation5 + $0xd8] sm:$0xf]
    %v138 = vld [vmem:[#allocation5 + $0xdc] sm:$0xf]
    %v139 = vld [vmem:[#allocation5 + $0xe0] sm:$0xf]
    %v140 = vld [vmem:[#allocation5 + $0xe4] sm:$0xf]
    %v141 = vld [vmem:[#allocation5 + $0xe8] sm:$0xf]
    %v142 = vld [vmem:[#allocation5 + $0xec] sm:$0xf]
    %v143 = vld [vmem:[#allocation5 + $0xf0] sm:$0xf]
    %v144 = vld [vmem:[#allocation5 + $0xf4] sm:$0xf]
    %v145 = vld [vmem:[#allocation5 + $0xf8] sm:$0xf]
    %v146 = vld [vmem:[#allocation5 + $0xfc] sm:$0xf]
    %v147 = vld [vmem:[#allocation5 + $0x100] sm:$0xf]
    %v148 = vld [vmem:[#allocation5 + $0x104] sm:$0xf]
    %v149 = vld [vmem:[#allocation5 + $0x108] sm:$0xf]
    %v150 = vld [vmem:[#allocation5 + $0x10c] sm:$0xf]
    %v151 = vld [vmem:[#allocation5 + $0x110] sm:$0xf]
    %v152 = vld [vmem:[#allocation5 + $0x114] sm:$0xf]
    %v153 = vld [vmem:[#allocation5 + $0x118] sm:$0xf]
    %v154 = vld [vmem:[#allocation5 + $0x11c] sm:$0xf]
    %v155 = vld [vmem:[#allocation5 + $0x120] sm:$0xf]
    %v156 = vld [vmem:[#allocation5 + $0x124] sm:$0xf]
    %v157 = vld [vmem:[#allocation5 + $0x128] sm:$0xf]
    %v158 = vld [vmem:[#allocation5 + $0x12c] sm:$0xf]
    %v159 = vld [vmem:[#allocation5 + $0x130] sm:$0xf]
    %v160 = vld [vmem:[#allocation5 + $0x134] sm:$0xf]
    %v161 = vld [vmem:[#allocation5 + $0x138] sm:$0xf]
    %v162 = vld [vmem:[#allocation5 + $0x13c] sm:$0xf]
    %v163 = vld [vmem:[#allocation5 + $0x140] sm:$0xf]
    %v164 = vld [vmem:[#allocation5 + $0x144] sm:$0xf]
    %v165 = vld [vmem:[#allocation5 + $0x148] sm:$0xf]
    %v166 = vld [vmem:[#allocation5 + $0x14c] sm:$0xf]
    %v167 = vld [vmem:[#allocation5 + $0x150] sm:$0xf]
    %v168 = vld [vmem:[#allocation5 + $0x154] sm:$0xf]
    %v169 = vld [vmem:[#allocation5 + $0x158] sm:$0xf]
    %v170 = vld [vmem:[#allocation5 + $0x15c] sm:$0xf]
    %v171 = vld [vmem:[#allocation5 + $0x160] sm:$0xf]
    %v172 = vld [vmem:[#allocation5 + $0x164] sm:$0xf]
    %v173 = vld [vmem:[#allocation5 + $0x168] sm:$0xf]
    %v174 = vld [vmem:[#allocation5 + $0x16c] sm:$0xf]
    %v175 = vld [vmem:[#allocation5 + $0x170] sm:$0xf]
    %v176 = vld [vmem:[#allocation5 + $0x174] sm:$0xf]
    %v177 = vld [vmem:[#allocation5 + $0x178] sm:$0xf]
    %v178 = vld [vmem:[#allocation5 + $0x17c] sm:$0xf]
    %v179 = vld [vmem:[#allocation5 + $0x180] sm:$0xf]
    %v180 = vld [vmem:[#allocation5 + $0x184] sm:$0xf]
    %v181 = vld [vmem:[#allocation5 + $0x188] sm:$0xf]
    %v182 = vld [vmem:[#allocation5 + $0x18c] sm:$0xf]
    %v183 = vld [vmem:[#allocation5 + $0x190] sm:$0xf]
    %v184 = vld [vmem:[#allocation5 + $0x194] sm:$0xf]
    %v185 = vld [vmem:[#allocation5 + $0x198] sm:$0xf]
    %v186 = vld [vmem:[#allocation5 + $0x19c] sm:$0xf]
    %v187 = vld [vmem:[#allocation5 + $0x1a0] sm:$0xf]
    %v188 = vld [vmem:[#allocation5 + $0x1a4] sm:$0xf]
    %v189 = vld [vmem:[#allocation5 + $0x1a8] sm:$0xf]
    %v190 = vld [vmem:[#allocation5 + $0x1ac] sm:$0xf]
    %v191 = vld [vmem:[#allocation5 + $0x1b0] sm:$0xf]
    %v192 = vld [vmem:[#allocation5 + $0x1b4] sm:$0xf]
    %v193 = vld [vmem:[#allocation5 + $0x1b8] sm:$0xf]
    %v194 = vld [vmem:[#allocation5 + $0x1bc] sm:$0xf]
    %v195 = vld [vmem:[#allocation5 + $0x1c0] sm:$0xf]
    %v196 = vld [vmem:[#allocation5 + $0x1c4] sm:$0xf]
    %v197 = vld [vmem:[#allocation5 + $0x1c8] sm:$0xf]
    %v198 = vld [vmem:[#allocation5 + $0x1cc] sm:$0xf]
    %v199 = vld [vmem:[#allocation5 + $0x1d0] sm:$0xf]
    %v200 = vld [vmem:[#allocation5 + $0x1d4] sm:$0xf]
    %v201 = vld [vmem:[#allocation5 + $0x1d8] sm:$0xf]
    %v202 = vld [vmem:[#allocation5 + $0x1dc] sm:$0xf]
    %v203 = vld [vmem:[#allocation5 + $0x1e0] sm:$0xf]
    %v204 = vld [vmem:[#allocation5 + $0x1e4] sm:$0xf]
    %v205 = vld [vmem:[#allocation5 + $0x1e8] sm:$0xf]
    %v206 = vld [vmem:[#allocation5 + $0x1ec] sm:$0xf]
    %v207 = vld [vmem:[#allocation5 + $0x1f0] sm:$0xf]
    %v208 = vld [vmem:[%s2] sm:$0x1]
    %v210 = vperm.slane %v208, 0
    %v337 = vunpack.c.l.b16 %v83
    %v338 = vunpack.c.l.b16 %v84
    %v339 = vunpack.c.l.b16 %v85
    %v340 = vunpack.c.l.b16 %v86
    %v341 = vunpack.c.l.b16 %v87
    %v342 = vunpack.c.l.b16 %v88
    %v343 = vunpack.c.l.b16 %v89
    %v344 = vunpack.c.l.b16 %v90
    %v345 = vunpack.c.l.b16 %v91
    %v346 = vunpack.c.l.b16 %v92
    %v347 = vunpack.c.l.b16 %v93
    %v348 = vunpack.c.l.b16 %v94
    %v349 = vunpack.c.l.b16 %v95
    %v350 = vunpack.c.l.b16 %v96
    %v351 = vunpack.c.l.b16 %v97
    %v352 = vunpack.c.l.b16 %v98
    %v353 = vunpack.c.l.b16 %v99
    %v354 = vunpack.c.l.b16 %v100
    %v355 = vunpack.c.l.b16 %v101
    %v356 = vunpack.c.l.b16 %v102
    %v357 = vunpack.c.l.b16 %v103
    %v358 = vunpack.c.l.b16 %v104
    %v359 = vunpack.c.l.b16 %v105
    %v360 = vunpack.c.l.b16 %v106
    %v361 = vunpack.c.l.b16 %v107
    %v362 = vunpack.c.l.b16 %v108
    %v363 = vunpack.c.l.b16 %v109
    %v364 = vunpack.c.l.b16 %v110
    %v365 = vunpack.c.l.b16 %v111
    %v366 = vunpack.c.l.b16 %v112
    %v367 = vunpack.c.l.b16 %v113
    %v368 = vunpack.c.l.b16 %v114
    %v369 = vunpack.c.l.b16 %v115
    %v370 = vunpack.c.l.b16 %v116
    %v371 = vunpack.c.l.b16 %v117
    %v372 = vunpack.c.l.b16 %v118
    %v373 = vunpack.c.l.b16 %v119
    %v374 = vunpack.c.l.b16 %v120
    %v375 = vunpack.c.l.b16 %v121
    %v376 = vunpack.c.l.b16 %v122
    %v377 = vunpack.c.l.b16 %v123
    %v378 = vunpack.c.l.b16 %v124
    %v379 = vunpack.c.l.b16 %v125
    %v380 = vunpack.c.l.b16 %v126
    %v381 = vunpack.c.l.b16 %v127
    %v382 = vunpack.c.l.b16 %v128
    %v383 = vunpack.c.l.b16 %v129
    %v384 = vunpack.c.l.b16 %v130
    %v385 = vunpack.c.l.b16 %v131
    %v386 = vunpack.c.l.b16 %v132
    %v387 = vunpack.c.l.b16 %v133
    %v388 = vunpack.c.l.b16 %v134
    %v389 = vunpack.c.l.b16 %v135
    %v390 = vunpack.c.l.b16 %v136
    %v391 = vunpack.c.l.b16 %v137
    %v392 = vunpack.c.l.b16 %v138
    %v393 = vunpack.c.l.b16 %v139
    %v394 = vunpack.c.l.b16 %v140
    %v395 = vunpack.c.l.b16 %v141
    %v396 = vunpack.c.l.b16 %v142
    %v397 = vunpack.c.l.b16 %v143
    %v398 = vunpack.c.l.b16 %v144
    %v399 = vunpack.c.l.b16 %v145
    %v400 = vunpack.c.l.b16 %v146
    %v401 = vunpack.c.l.b16 %v147
    %v402 = vunpack.c.l.b16 %v148
    %v403 = vunpack.c.l.b16 %v149
    %v404 = vunpack.c.l.b16 %v150
    %v405 = vunpack.c.l.b16 %v151
    %v406 = vunpack.c.l.b16 %v152
    %v407 = vunpack.c.l.b16 %v153
    %v408 = vunpack.c.l.b16 %v154
    %v409 = vunpack.c.l.b16 %v155
    %v410 = vunpack.c.l.b16 %v156
    %v411 = vunpack.c.l.b16 %v157
    %v412 = vunpack.c.l.b16 %v158
    %v413 = vunpack.c.l.b16 %v159
    %v414 = vunpack.c.l.b16 %v160
    %v415 = vunpack.c.l.b16 %v161
    %v416 = vunpack.c.l.b16 %v162
    %v417 = vunpack.c.l.b16 %v163
    %v418 = vunpack.c.l.b16 %v164
    %v419 = vunpack.c.l.b16 %v165
    %v420 = vunpack.c.l.b16 %v166
    %v421 = vunpack.c.l.b16 %v167
    %v422 = vunpack.c.l.b16 %v168
    %v423 = vunpack.c.l.b16 %v169
    %v424 = vunpack.c.l.b16 %v170
    %v425 = vunpack.c.l.b16 %v171
    %v426 = vunpack.c.l.b16 %v172
    %v427 = vunpack.c.l.b16 %v173
    %v428 = vunpack.c.l.b16 %v174
    %v429 = vunpack.c.l.b16 %v175
    %v430 = vunpack.c.l.b16 %v176
    %v431 = vunpack.c.l.b16 %v177
    %v432 = vunpack.c.l.b16 %v178
    %v433 = vunpack.c.l.b16 %v179
    %v434 = vunpack.c.l.b16 %v180
    %v435 = vunpack.c.l.b16 %v181
    %v436 = vunpack.c.l.b16 %v182
    %v437 = vunpack.c.l.b16 %v183
    %v438 = vunpack.c.l.b16 %v184
    %v439 = vunpack.c.l.b16 %v185
    %v440 = vunpack.c.l.b16 %v186
    %v441 = vunpack.c.l.b16 %v187
    %v442 = vunpack.c.l.b16 %v188
    %v443 = vunpack.c.l.b16 %v189
    %v444 = vunpack.c.l.b16 %v190
    %v445 = vunpack.c.l.b16 %v191
    %v446 = vunpack.c.l.b16 %v192
    %v447 = vunpack.c.l.b16 %v193
    %v448 = vunpack.c.l.b16 %v194
    %v449 = vunpack.c.l.b16 %v195
    %v450 = vunpack.c.l.b16 %v196
    %v451 = vunpack.c.l.b16 %v197
    %v452 = vunpack.c.l.b16 %v198
    %v453 = vunpack.c.l.b16 %v199
    %v454 = vunpack.c.l.b16 %v200
    %v455 = vunpack.c.l.b16 %v201
    %v456 = vunpack.c.l.b16 %v202
    %v457 = vunpack.c.l.b16 %v203
    %v458 = vunpack.c.l.b16 %v204
    %v459 = vunpack.c.l.b16 %v205
    %v460 = vunpack.c.l.b16 %v206
    %v461 = vunpack.c.l.b16 %v207
    %v462 = vpack.c.b16 %v338, %v337
    %v463 = vpack.c.b16 %v340, %v339
    %v464 = vpack.c.b16 %v342, %v341
    %v465 = vpack.c.b16 %v344, %v343
    %v466 = vpack.c.b16 %v346, %v345
    %v467 = vpack.c.b16 %v348, %v347
    %v468 = vpack.c.b16 %v350, %v349
    %v469 = vpack.c.b16 %v352, %v351
    %v470 = vpack.c.b16 %v354, %v353
    %v471 = vpack.c.b16 %v356, %v355
    %v472 = vpack.c.b16 %v358, %v357
    %v473 = vpack.c.b16 %v360, %v359
    %v474 = vpack.c.b16 %v362, %v361
    %v475 = vpack.c.b16 %v364, %v363
    %v476 = vpack.c.b16 %v366, %v365
    %v477 = vpack.c.b16 %v368, %v367
    %v478 = vpack.c.b16 %v370, %v369
    %v479 = vpack.c.b16 %v372, %v371
    %v480 = vpack.c.b16 %v374, %v373
    %v481 = vpack.c.b16 %v376, %v375
    %v482 = vpack.c.b16 %v378, %v377
    %v483 = vpack.c.b16 %v380, %v379
    %v484 = vpack.c.b16 %v382, %v381
    %v485 = vpack.c.b16 %v384, %v383
    %v486 = vpack.c.b16 %v386, %v385
    %v487 = vpack.c.b16 %v388, %v387
    %v488 = vpack.c.b16 %v390, %v389
    %v489 = vpack.c.b16 %v392, %v391
    %v490 = vpack.c.b16 %v394, %v393
    %v491 = vpack.c.b16 %v396, %v395
    %v492 = vpack.c.b16 %v398, %v397
    %v493 = vpack.c.b16 %v400, %v399
    %v494 = vpack.c.b16 %v402, %v401
    %v495 = vpack.c.b16 %v404, %v403
    %v496 = vpack.c.b16 %v406, %v405
    %v497 = vpack.c.b16 %v408, %v407
    %v498 = vpack.c.b16 %v410, %v409
    %v499 = vpack.c.b16 %v412, %v411
    %v500 = vpack.c.b16 %v414, %v413
    %v501 = vpack.c.b16 %v416, %v415
    %v502 = vpack.c.b16 %v418, %v417
    %v503 = vpack.c.b16 %v420, %v419
    %v504 = vpack.c.b16 %v422, %v421
    %v505 = vpack.c.b16 %v424, %v423
    %v506 = vpack.c.b16 %v426, %v425
    %v507 = vpack.c.b16 %v428, %v427
    %v508 = vpack.c.b16 %v430, %v429
    %v509 = vpack.c.b16 %v432, %v431
    %v510 = vpack.c.b16 %v434, %v433
    %v511 = vpack.c.b16 %v436, %v435
    %v512 = vpack.c.b16 %v438, %v437
    %v513 = vpack.c.b16 %v440, %v439
    %v514 = vpack.c.b16 %v442, %v441
    %v515 = vpack.c.b16 %v444, %v443
    %v516 = vpack.c.b16 %v446, %v445
    %v517 = vpack.c.b16 %v448, %v447
    %v518 = vpack.c.b16 %v450, %v449
    %v519 = vpack.c.b16 %v452, %v451
    %v520 = vpack.c.b16 %v454, %v453
    %v521 = vpack.c.b16 %v456, %v455
    %v522 = vpack.c.b16 %v458, %v457
    %v523 = vpack.c.b16 %v460, %v459
    %v524 = vpack.c.b16 %v461, %v461
    %vm587 = vcmask 850944
    %v589 = vsel %vm587, %v82, 0
    %vm591 = vcmask 1043456
    %v593 = vsel %vm591, %v524, 0
    %595 = vmatpush.bf16.msra.mxu0 %v469
    %596 = vmatpush.bf16.msra.mxu0 %v468
    %597 = vmatpush.bf16.msra.mxu0 %v467
    %598 = vmatpush.bf16.msra.mxu0 %v466
    %599 = vmatpush.bf16.msra.mxu0 %v465
    %600 = vmatpush.bf16.msra.mxu0 %v464
    %601 = vmatpush.bf16.msra.mxu0 %v463
    %602 = vmatpush.bf16.msra.mxu0 %v462
    %603 = vmatmul.bf16.gmra.mxu0 %v75
    %v604 = vpop.f32.mrf.mxu0
    %v605 = vadd.f32 %v210, %v604
    %v606 = vpop.f32.mrf.mxu0
    %607 = vdwg.mxu0
    %608 = vmatpush.bf16.msra.mxu0 %v477
    %609 = vmatpush.bf16.msra.mxu0 %v476
    %610 = vmatpush.bf16.msra.mxu0 %v475
    %611 = vmatpush.bf16.msra.mxu0 %v474
    %612 = vmatpush.bf16.msra.mxu0 %v473
    %613 = vmatpush.bf16.msra.mxu0 %v472
    %614 = vmatpush.bf16.msra.mxu0 %v471
    %615 = vmatpush.bf16.msra.mxu0 %v470
    %616 = vmatmul.bf16.gmra.mxu0 %v76
    %v617 = vpop.f32.mrf.mxu0
    %v618 = vadd.f32 %v605, %v617
    %v619 = vpop.f32.mrf.mxu0
    %620 = vdwg.mxu0
    %621 = vmatpush.bf16.msra.mxu0 %v485
    %622 = vmatpush.bf16.msra.mxu0 %v484
    %623 = vmatpush.bf16.msra.mxu0 %v483
    %624 = vmatpush.bf16.msra.mxu0 %v482
    %625 = vmatpush.bf16.msra.mxu0 %v481
    %626 = vmatpush.bf16.msra.mxu0 %v480
    %627 = vmatpush.bf16.msra.mxu0 %v479
    %628 = vmatpush.bf16.msra.mxu0 %v478
    %629 = vmatmul.bf16.gmra.mxu0 %v77
    %v630 = vpop.f32.mrf.mxu0
    %v631 = vadd.f32 %v618, %v630
    %v632 = vpop.f32.mrf.mxu0
    %633 = vdwg.mxu0
    %634 = vmatpush.bf16.msra.mxu0 %v493
    %635 = vmatpush.bf16.msra.mxu0 %v492
    %636 = vmatpush.bf16.msra.mxu0 %v491
    %637 = vmatpush.bf16.msra.mxu0 %v490
    %638 = vmatpush.bf16.msra.mxu0 %v489
    %639 = vmatpush.bf16.msra.mxu0 %v488
    %640 = vmatpush.bf16.msra.mxu0 %v487
    %641 = vmatpush.bf16.msra.mxu0 %v486
    %642 = vmatmul.bf16.gmra.mxu0 %v78
    %v643 = vpop.f32.mrf.mxu0
    %v644 = vadd.f32 %v631, %v643
    %v645 = vpop.f32.mrf.mxu0
    %646 = vdwg.mxu0
    %647 = vmatpush.bf16.msra.mxu0 %v501
    %648 = vmatpush.bf16.msra.mxu0 %v500
    %649 = vmatpush.bf16.msra.mxu0 %v499
    %650 = vmatpush.bf16.msra.mxu0 %v498
    %651 = vmatpush.bf16.msra.mxu0 %v497
    %652 = vmatpush.bf16.msra.mxu0 %v496
    %653 = vmatpush.bf16.msra.mxu0 %v495
    %654 = vmatpush.bf16.msra.mxu0 %v494
    %655 = vmatmul.bf16.gmra.mxu0 %v79
    %v656 = vpop.f32.mrf.mxu0
    %v657 = vadd.f32 %v644, %v656
    %v658 = vpop.f32.mrf.mxu0
    %659 = vdwg.mxu0
    %660 = vmatpush.bf16.msra.mxu0 %v509
    %661 = vmatpush.bf16.msra.mxu0 %v508
    %662 = vmatpush.bf16.msra.mxu0 %v507
    %663 = vmatpush.bf16.msra.mxu0 %v506
    %664 = vmatpush.bf16.msra.mxu0 %v505
    %665 = vmatpush.bf16.msra.mxu0 %v504
    %666 = vmatpush.bf16.msra.mxu0 %v503
    %667 = vmatpush.bf16.msra.mxu0 %v502
    %668 = vmatmul.bf16.gmra.mxu0 %v80
    %v669 = vpop.f32.mrf.mxu0
    %v670 = vadd.f32 %v657, %v669
    %v671 = vpop.f32.mrf.mxu0
    %672 = vdwg.mxu0
    %673 = vmatpush.bf16.msra.mxu0 %v517
    %674 = vmatpush.bf16.msra.mxu0 %v516
    %675 = vmatpush.bf16.msra.mxu0 %v515
    %676 = vmatpush.bf16.msra.mxu0 %v514
    %677 = vmatpush.bf16.msra.mxu0 %v513
    %678 = vmatpush.bf16.msra.mxu0 %v512
    %679 = vmatpush.bf16.msra.mxu0 %v511
    %680 = vmatpush.bf16.msra.mxu0 %v510
    %681 = vmatmul.bf16.gmra.mxu0 %v81
    %v682 = vpop.f32.mrf.mxu0
    %v683 = vadd.f32 %v670, %v682
    %v684 = vpop.f32.mrf.mxu0
    %685 = vdwg.mxu0
    %686 = vmatpush.bf16.msra.mxu0 0
    %687 = vmatpush.bf16.msra.mxu0 %v593
    %688 = vmatpush.bf16.msra.mxu0 %v523
    %689 = vmatpush.bf16.msra.mxu0 %v522
    %690 = vmatpush.bf16.msra.mxu0 %v521
    %691 = vmatpush.bf16.msra.mxu0 %v520
    %692 = vmatpush.bf16.msra.mxu0 %v519
    %693 = vmatpush.bf16.msra.mxu0 %v518
    %694 = vmatmul.bf16.gmra.mxu0 %v589
    %v695 = vpop.f32.mrf.mxu0
    %v696 = vadd.f32 %v683, %v695
    %v697 = vpop.f32.mrf.mxu0
    %698 = vdwg.mxu0
    %v699 = vmax.f32 %v696, 0.0
    %v700 = vpack.c.bf16 %v699, %v699
    %v701 = vld [vmem:[#allocation7] sm:$0xf]
    %v702 = vld [vmem:[#allocation7 + $0x4] sm:$0xf]
    %v703 = vld [vmem:[#allocation7 + $0x8] sm:$0xf]
    %v704 = vld [vmem:[#allocation7 + $0xc] sm:$0xf]
    %v705 = vld [vmem:[#allocation7 + $0x10] sm:$0xf]
    %v706 = vld [vmem:[#allocation7 + $0x14] sm:$0xf]
    %v707 = vld [vmem:[#allocation7 + $0x18] sm:$0xf]
    %v708 = vld [vmem:[#allocation7 + $0x1c] sm:$0xf]
    %v709 = vld [vmem:[#allocation7 + $0x20] sm:$0xf]
    %v710 = vld [vmem:[#allocation7 + $0x24] sm:$0xf]
    %v711 = vld [vmem:[#allocation7 + $0x28] sm:$0xf]
    %v712 = vld [vmem:[#allocation7 + $0x2c] sm:$0xf]
    %v713 = vld [vmem:[#allocation7 + $0x30] sm:$0xf]
    %v714 = vld [vmem:[#allocation7 + $0x34] sm:$0xf]
    %v715 = vld [vmem:[#allocation7 + $0x38] sm:$0xf]
    %v716 = vld [vmem:[#allocation7 + $0x3c] sm:$0xf]
    %v717 = vld [vmem:[%s4] sm:$0x1]
    %v719 = vperm.slane %v717, 0
    %v737 = vunpack.c.l.b16 %v701
    %v738 = vunpack.c.l.b16 %v702
    %v739 = vunpack.c.l.b16 %v703
    %v740 = vunpack.c.l.b16 %v704
    %v741 = vunpack.c.l.b16 %v705
    %v742 = vunpack.c.l.b16 %v706
    %v743 = vunpack.c.l.b16 %v707
    %v744 = vunpack.c.l.b16 %v708
    %v745 = vunpack.c.l.b16 %v709
    %v746 = vunpack.c.l.b16 %v710
    %v747 = vunpack.c.l.b16 %v711
    %v748 = vunpack.c.l.b16 %v712
    %v749 = vunpack.c.l.b16 %v713
    %v750 = vunpack.c.l.b16 %v714
    %v751 = vunpack.c.l.b16 %v715
    %v752 = vunpack.c.l.b16 %v716
    %v753 = vpack.c.b16 %v738, %v737
    %v754 = vpack.c.b16 %v740, %v739
    %v755 = vpack.c.b16 %v742, %v741
    %v756 = vpack.c.b16 %v744, %v743
    %v757 = vpack.c.b16 %v746, %v745
    %v758 = vpack.c.b16 %v748, %v747
    %v759 = vpack.c.b16 %v750, %v749
    %v760 = vpack.c.b16 %v752, %v751
    %769 = vmatpush.bf16.msra.mxu0 %v760
    %770 = vmatpush.bf16.msra.mxu0 %v759
    %771 = vmatpush.bf16.msra.mxu0 %v758
    %772 = vmatpush.bf16.msra.mxu0 %v757
    %773 = vmatpush.bf16.msra.mxu0 %v756
    %774 = vmatpush.bf16.msra.mxu0 %v755
    %775 = vmatpush.bf16.msra.mxu0 %v754
    %776 = vmatpush.bf16.msra.mxu0 %v753
    %777 = vmatmul.bf16.gmra.mxu0 %v700
    %v778 = vpop.f32.mrf.mxu0
    %v779 = vadd.f32 %v719, %v778
    %v780 = vpop.f32.mrf.mxu0
    %781 = vdwg.mxu0
    %782 = vmax.xlane.f32.xlu0 %v779
    %v783 = vpop.xlane.xlu0 %782
    %v784 = vsub.f32 %v779, %v783
    %v785 = vmul.f32 %v784, 1.442695
    %v786 = vpow.pop %v785
    %787 = vadd.xlane.f32.xlu0 %v786
    %v788 = vpop.xlane.xlu0 %787
    %v789 = vrcp.pop %v788
    %v790 = vmul.f32 %v788, %v789
    %v791 = vsub.f32 1.0, %v790
    %v792 = vmul.f32 %v789, %v791
    %v793 = vadd.f32 %v789, %v792
    %vm794 = vweird.f32 %v788
    %vm795 = vweird.f32 %v789
    %vm796 = vmor %vm794, %vm795
    %v797 = vsel %vm796, %v789, %v793
    %v798 = vand.u32 2147483647, %v788
    %vm799 = vcmp.eq.f32.partialorder %v798, 8.507059e+37
    %v800 = vand.u32 %v788, 2147483648
    %v801 = vor.u32 1.1754944e-38, %v800
    %v802 = vsel %vm799, %v801, %v797
    %v803 = vmul.f32 %v786, %v802
    %804 = vst [vmem:[#allocation8] sm:$0xff] %v803
    // Predicated region
    $region34: #{classif_forward.1} parent=1 // pred_check
      _
    $region35: #{classif_forward.1} parent=1 // pred_check_branch
      %806 = sbr.rel (0) target = $region37
    $region36: #{classif_forward.1} parent=1 // pred_region
      %808 = vsyncadd [#allocation4], 0
      %s810 = sshll.u32 [#allocation8], 4
      %s811 = int_to_ptr.vmem [resolvable:$true] %s810
      %s812 = sshll.u32 %s5, 4
      %s813 = int_to_ptr.hbm [resolvable:$true] %s812
      %815 = dma.vmem_to_hbm [thread:$0]  %s811, 128, %s813, [#allocation4]
    $region37: #{classif_forward.1} parent=1 // pred_fallthru
      _
    // Predicated region
    $region38: #{classif_forward.1} parent=1 // pred_check
      _
    $region39: #{classif_forward.1} parent=1 // pred_check_branch
      %817 = sbr.rel (0) target = $region41
    $region40: #{classif_forward.1} parent=1 // pred_region
      %819 = dma.done [#allocation4], 128
    $region41: #{classif_forward.1} parent=1 // pred_fallthru
      _
    %820 = vsyncpa [#allocation3], 1
    %821 = vsyncpa [#allocation6], 1
    %822 = vsyncpa [#allocation4], 1

</llo_original>
